<compile_context>
chip_gen: v6e
topology: v6e:2x2x1
jax: 0.10.0
libtpu: 0.0.40
codegen_flags: <defaults>
</compile_context>

<pallas_src>
import functools

import jax
import jax.numpy as jnp
from jax.experimental import pallas as pl
from jax.experimental.pallas import tpu as pltpu

# Synthetic environment sizes (CartPole-like): obs dim 4, 2 discrete actions.
N_STATES = 4
N_ACTIONS = 2
HIDDEN = 50

SUBLANE = 8
LANE = 128
HIDDEN_PAD = 128   # hidden width padded to a full lane tile
OUT_PAD = 128      # output width padded -> unmasked lane-dense stores


def _round_up(x, m):
    return (x + m - 1) // m * m


def net_kernel(x_ref, w1_ref, b1_ref, w2_ref, b2_ref, o_ref):
    # fc1: x @ W1 + b1  (MXU matmul, f32 accumulate), then ReLU on the VPU.
    h = jnp.dot(x_ref[...], w1_ref[...], preferred_element_type=jnp.float32)
    h = jnp.maximum(h + b1_ref[...], 0.0)           # [BT, HIDDEN_PAD]
    # out: h @ W2 + b2 — padded columns are zero, sliced off in the wrapper.
    q = jnp.dot(h, w2_ref[...], preferred_element_type=jnp.float32)
    o_ref[...] = (q + b2_ref[...]).astype(o_ref.dtype)


def pad_params(w1, b1, w2, b2):
    """Zero-pad [in, out]-layout params to lane-dense kernel shapes."""
    w1p = jnp.zeros((N_STATES, HIDDEN_PAD), jnp.float32).at[:, :HIDDEN].set(w1)
    b1p = jnp.zeros((1, HIDDEN_PAD), jnp.float32).at[:, :HIDDEN].set(
        b1.reshape(1, -1))
    w2p = jnp.zeros((HIDDEN_PAD, OUT_PAD), jnp.float32).at[
        :HIDDEN, :N_ACTIONS].set(w2)
    b2p = jnp.zeros((1, OUT_PAD), jnp.float32).at[:, :N_ACTIONS].set(
        b2.reshape(1, -1))
    return w1p, b1p, w2p, b2p


@functools.partial(jax.jit, static_argnames=("block_b",))
def net_forward(x, w1p, b1p, w2p, b2p, block_b=512):
    """x: [B, N_STATES] f32. Params are the padded ones from pad_params.
    Returns action values [B, N_ACTIONS] f32."""
    B = x.shape[0]
    # Batch tile: multiple of the 8-row sublane, capped at block_b.
    BT = min(block_b, _round_up(B, SUBLANE))
    Bp = _round_up(B, BT)
    xp = x if Bp == B else jnp.pad(x, ((0, Bp - B), (0, 0)))

    const = lambda i: (0, 0)   # weights: same block every step -> resident
    out = pl.pallas_call(
        net_kernel,
        out_shape=jax.ShapeDtypeStruct((Bp, OUT_PAD), jnp.float32),
        grid=(Bp // BT,),
        in_specs=[
            pl.BlockSpec((BT, N_STATES), lambda i: (i, 0)),       # x tile
            pl.BlockSpec((N_STATES, HIDDEN_PAD), const),          # W1
            pl.BlockSpec((1, HIDDEN_PAD), const),                 # b1
            pl.BlockSpec((HIDDEN_PAD, OUT_PAD), const),           # W2
            pl.BlockSpec((1, OUT_PAD), const),                    # b2
        ],
        out_specs=pl.BlockSpec((BT, OUT_PAD), lambda i: (i, 0)),
        compiler_params=pltpu.CompilerParams(
            dimension_semantics=("parallel",)),
    )(xp, w1p, b1p, w2p, b2p)
    return out[:B, :N_ACTIONS]


def init_params(key):
    """Mirrors the PyTorch module: weights ~ Normal(0, 0.1); biases use the
    default nn.Linear uniform init. Weights stored transposed ([in, out])."""
    k1, k2, k3, k4 = jax.random.split(key, 4)
    w1 = 0.1 * jax.random.normal(k1, (N_STATES, HIDDEN), dtype=jnp.float32)
    w2 = 0.1 * jax.random.normal(k2, (HIDDEN, N_ACTIONS), dtype=jnp.float32)
    bound1 = 1.0 / (N_STATES ** 0.5)
    bound2 = 1.0 / (HIDDEN ** 0.5)
    b1 = jax.random.uniform(k3, (HIDDEN,), jnp.float32, -bound1, bound1)
    b2 = jax.random.uniform(k4, (N_ACTIONS,), jnp.float32, -bound2, bound2)
    return w1, b1, w2, b2


if __name__ == "__main__":
    key = jax.random.PRNGKey(0)
    kx, kp = jax.random.split(key)

    w1, b1, w2, b2 = init_params(kp)
    w1p, b1p, w2p, b2p = pad_params(w1, b1, w2, b2)

    def reference(x):
        return jnp.maximum(x @ w1 + b1[None, :], 0.0) @ w2 + b2[None, :]

    # Small online-inference-style batch.
    B = 8
    x = jax.random.normal(kx, (B, N_STATES), dtype=jnp.float32)
    out = net_forward(x, w1p, b1p, w2p, b2p)
    jax.block_until_ready(out)
    assert out.shape == (B, N_ACTIONS)
    assert jnp.allclose(out, reference(x), atol=1e-5), "mismatch (small B)"

    # Larger batch exercising the grid (>1 step) and the ragged-batch padding.
    B2 = 1000
    x2 = jax.random.normal(jax.random.PRNGKey(1), (B2, N_STATES),
                           dtype=jnp.float32)
    out2 = net_forward(x2, w1p, b1p, w2p, b2p, block_b=256)
    jax.block_until_ready(out2)
    assert out2.shape == (B2, N_ACTIONS)
    assert jnp.allclose(out2, reference(x2), atol=1e-5), "mismatch (large B)"

    print("KERNEL_OK")
</pallas_src>

<mosaic_0001>
module attributes {stable_mosaic.version = 11 : i64} {
  func.func @net_kernel(%arg0: i32, %arg1: memref<8x4xf32, #tpu.memory_space<vmem>>, %arg2: memref<4x128xf32, #tpu.memory_space<vmem>>, %arg3: memref<1x128xf32, #tpu.memory_space<vmem>>, %arg4: memref<128x128xf32, #tpu.memory_space<vmem>>, %arg5: memref<1x128xf32, #tpu.memory_space<vmem>>, %arg6: memref<8x128xf32, #tpu.memory_space<vmem>>) attributes {dimension_semantics = [#tpu.dimension_semantics<parallel>], iteration_bounds = array<i64: 1>, scalar_prefetch = 0 : i64, scratch_operands = 0 : i64, tpu.core_type = #tpu.core_type<tc>, window_params = [{transform_indices = @transform_0, window_bounds = array<i64: 8, 4>}, {pipeline_mode = #tpu.pipeline_mode<synchronous>, transform_indices = @transform_1, window_bounds = array<i64: 4, 128>}, {pipeline_mode = #tpu.pipeline_mode<synchronous>, transform_indices = @transform_2, window_bounds = array<i64: 1, 128>}, {pipeline_mode = #tpu.pipeline_mode<synchronous>, transform_indices = @transform_3, window_bounds = array<i64: 128, 128>}, {pipeline_mode = #tpu.pipeline_mode<synchronous>, transform_indices = @transform_4, window_bounds = array<i64: 1, 128>}, {transform_indices = @transform_5, window_bounds = array<i64: 8, 128>}]} {
    %c0 = arith.constant 0 : index
    %c0_0 = arith.constant 0 : index
    %0 = vector.load %arg1[%c0, %c0_0] : memref<8x4xf32, #tpu.memory_space<vmem>>, vector<8x4xf32>
    %c0_1 = arith.constant 0 : index
    %c0_2 = arith.constant 0 : index
    %1 = vector.load %arg2[%c0_1, %c0_2] : memref<4x128xf32, #tpu.memory_space<vmem>>, vector<4x128xf32>
    %cst = arith.constant dense<0.000000e+00> : vector<8x128xf32>
    %2 = tpu.matmul %0, %1, %cst {dimension_numbers = #tpu.dot_dimension_numbers<[1], [0], [0], [1], [0, 0, 1, 1], [], []>} : vector<8x4xf32>, vector<4x128xf32>, vector<8x128xf32> -> vector<8x128xf32>
    %c0_3 = arith.constant 0 : index
    %c0_4 = arith.constant 0 : index
    %3 = vector.load %arg3[%c0_3, %c0_4] : memref<1x128xf32, #tpu.memory_space<vmem>>, vector<1x128xf32>
    %4 = vector.broadcast %3 : vector<1x128xf32> to vector<8x128xf32>
    %5 = arith.addf %2, %4 : vector<8x128xf32>
    %cst_5 = arith.constant 0.000000e+00 : f32
    %6 = vector.broadcast %cst_5 : f32 to vector<8x128xf32>
    %7 = arith.maximumf %5, %6 : vector<8x128xf32>
    %c0_6 = arith.constant 0 : index
    %c0_7 = arith.constant 0 : index
    %8 = vector.load %arg4[%c0_6, %c0_7] : memref<128x128xf32, #tpu.memory_space<vmem>>, vector<128x128xf32>
    %cst_8 = arith.constant dense<0.000000e+00> : vector<8x128xf32>
    %9 = tpu.matmul %7, %8, %cst_8 {dimension_numbers = #tpu.dot_dimension_numbers<[1], [0], [0], [1], [0, 0, 1, 1], [], []>} : vector<8x128xf32>, vector<128x128xf32>, vector<8x128xf32> -> vector<8x128xf32>
    %c0_9 = arith.constant 0 : index
    %c0_10 = arith.constant 0 : index
    %10 = vector.load %arg5[%c0_9, %c0_10] : memref<1x128xf32, #tpu.memory_space<vmem>>, vector<1x128xf32>
    %11 = vector.broadcast %10 : vector<1x128xf32> to vector<8x128xf32>
    %12 = arith.addf %9, %11 : vector<8x128xf32>
    %c0_11 = arith.constant 0 : index
    %c0_12 = arith.constant 0 : index
    %13 = vector.load %arg6[%c0_11, %c0_12] : memref<8x128xf32, #tpu.memory_space<vmem>>, vector<8x128xf32>
    tpu.vector_store %arg6[%c0_11, %c0_12], %12 {strides = array<i32>} : memref<8x128xf32, #tpu.memory_space<vmem>>, vector<8x128xf32>,
    return
  }
  func.func @transform_0(%arg0: i32) -> (i32, i32) {
    %c0_i32 = arith.constant 0 : i32
    %c0_i32_0 = arith.constant 0 : i32
    return %arg0, %c0_i32 : i32, i32
  }
  func.func @transform_1(%arg0: i32) -> (i32, i32) {
    %c0_i32 = arith.constant 0 : i32
    %c0_i32_0 = arith.constant 0 : i32
    %c0_i32_1 = arith.constant 0 : i32
    return %c0_i32, %c0_i32_0 : i32, i32
  }
  func.func @transform_2(%arg0: i32) -> (i32, i32) {
    %c0_i32 = arith.constant 0 : i32
    %c0_i32_0 = arith.constant 0 : i32
    %c0_i32_1 = arith.constant 0 : i32
    return %c0_i32, %c0_i32_0 : i32, i32
  }
  func.func @transform_3(%arg0: i32) -> (i32, i32) {
    %c0_i32 = arith.constant 0 : i32
    %c0_i32_0 = arith.constant 0 : i32
    %c0_i32_1 = arith.constant 0 : i32
    return %c0_i32, %c0_i32_0 : i32, i32
  }
  func.func @transform_4(%arg0: i32) -> (i32, i32) {
    %c0_i32 = arith.constant 0 : i32
    %c0_i32_0 = arith.constant 0 : i32
    %c0_i32_1 = arith.constant 0 : i32
    return %c0_i32, %c0_i32_0 : i32, i32
  }
  func.func @transform_5(%arg0: i32) -> (i32, i32) {
    %c0_i32 = arith.constant 0 : i32
    %c0_i32_0 = arith.constant 0 : i32
    return %arg0, %c0_i32 : i32, i32
  }
}

</mosaic_0001>

<llo_original>
// kernel: net_forward.1
$region0: #{net_forward.1}
  #allocation0 [shape = 'u32[]', space=smem, size = 0x4, offset = 0x4, fixed_abs, tag = 'smem constant byte address 0x4 - core index']
  #allocation1 [shape = 'u32[144,128]{1,0:T(1,128)}', space=vmem, size = 0x12000, scoped, tag = 'internal scratch']
  %s0 = inlined_call_operand.vmem [shape: f32[8,4], index: 0, kind: input, shape index: {}]
  %s1 = inlined_call_operand.vmem [shape: f32[4,128], index: 1, kind: input, shape index: {}]
  %s2 = inlined_call_operand.vmem [shape: f32[1,128], index: 2, kind: input, shape index: {}]
  %s3 = inlined_call_operand.hbm [shape: f32[128,128], index: 3, kind: input, shape index: {}]
  %s4 = inlined_call_operand.vmem [shape: f32[1,128], index: 4, kind: input, shape index: {}]
  %s5 = inlined_call_operand.vmem [shape: f32[8,128], index: 5, kind: output, shape index: {}]
  %s6 = sld [smem:[#allocation0]]
  $region34: #{net_forward.1} parent=0
    _
  %s8 = ssub.s32 1, %s6
  %s9 = scalar_select 0, %s8, %s6
  $region1: #{net_forward.1} parent=0
    #allocation2 [shape = 'u8[65536]{0}', space=vmem, size = 0x10000, scoped, tag = 'input window, operand 3, single buffered']
    #allocation3 [shape = 's32[1]{0}', space=sflag, size = 0x4, scoped, tag = 'scoped memory for net_forward.1']
    %10 = vsyncpa [#allocation3], 0
    // Predicated region
    $region2: #{net_forward.1} parent=1 // pred_check
      _
    $region3: #{net_forward.1} parent=1 // pred_check_branch
      %12 = sbr.rel (0) target = $region5
    $region4: #{net_forward.1} parent=1 // pred_region
      _
    $region5: #{net_forward.1} parent=1 // pred_fallthru
      _
    // Predicated region
    $region6: #{net_forward.1} parent=1 // pred_check
      _
    $region7: #{net_forward.1} parent=1 // pred_check_branch
      %14 = sbr.rel (0) target = $region9
    $region8: #{net_forward.1} parent=1 // pred_region
      _
    $region9: #{net_forward.1} parent=1 // pred_fallthru
      _
    // Predicated region
    $region10: #{net_forward.1} parent=1 // pred_check
      _
    $region11: #{net_forward.1} parent=1 // pred_check_branch
      %16 = sbr.rel (0) target = $region13
    $region12: #{net_forward.1} parent=1 // pred_region
      _
    $region13: #{net_forward.1} parent=1 // pred_fallthru
      _
    // Predicated region
    $region14: #{net_forward.1} parent=1 // pred_check
      _
    $region15: #{net_forward.1} parent=1 // pred_check_branch
      %18 = sbr.rel (0) target = $region17
    $region16: #{net_forward.1} parent=1 // pred_region
      %s20 = ssub.s32 2048, 2048
      %21 = vsyncadd [#allocation3], %s20
      %s22 = sshll.u32 [#allocation2], 4
      %s23 = int_to_ptr.vmem [resolvable:$true] %s22
      %28 = dma.hbm_to_vmem [thread:$0]  %s3, 2048, %s23, [#allocation3], 128, 128, 8
    $region17: #{net_forward.1} parent=1 // pred_fallthru
      _
    // Predicated region
    $region18: #{net_forward.1} parent=1 // pred_check
      _
    $region19: #{net_forward.1} parent=1 // pred_check_branch
      %30 = sbr.rel (0) target = $region21
    $region20: #{net_forward.1} parent=1 // pred_region
      _
    $region21: #{net_forward.1} parent=1 // pred_fallthru
      _
    // Predicated region
    $region22: #{net_forward.1} parent=1 // pred_check
      _
    $region23: #{net_forward.1} parent=1 // pred_check_branch
      %32 = sbr.rel (0) target = $region25
    $region24: #{net_forward.1} parent=1 // pred_region
      %33 = dma.done [#allocation3], 2048
    $region25: #{net_forward.1} parent=1 // pred_fallthru
      _
    %v34 = vld [vmem:[%s0] sm:$0xff]
    %v35 = vld [vmem:[%s1] sm:$0xf]
    %v36 = vld [vmem:[%s2] sm:$0x1]
    %v38 = vlaneseq
    %v39 = vshrl.u32 %v38, 7
    %v40 = vsub.s32 0, %v39
    %v41 = vrot.slane %v36, %v40
    %vm43 = vcmask 31744
    %v45 = vsel %vm43, %v34, 0
    %vm47 = vcmask 1043456
    %v49 = vsel %vm47, %v35, 0
    %51 = vmatprep.subr.mxu0 0.0
    %52 = vmatpush1.msra.mxu0 0.0
    %53 = vmatprep.subr.mxu0 0.0
    %54 = vmatpush1.msra.mxu0 0.0
    %55 = vmatprep.subr.mxu0 0.0
    %56 = vmatpush1.msra.mxu0 0.0
    %57 = vmatprep.subr.mxu0 0.0
    %58 = vmatpush1.msra.mxu0 0.0
    %59 = vmatprep.subr.mxu0 0.0
    %60 = vmatpush1.msra.mxu0 0.0
    %61 = vmatprep.subr.mxu0 0.0
    %62 = vmatpush1.msra.mxu0 0.0
    %63 = vmatprep.subr.mxu0 0.0
    %64 = vmatpush1.msra.mxu0 0.0
    %65 = vmatprep.subr.mxu0 0.0
    %66 = vmatpush1.msra.mxu0 0.0
    %67 = vmatprep.subr.mxu0 0.0
    %68 = vmatpush1.msra.mxu0 0.0
    %69 = vmatprep.subr.mxu0 0.0
    %70 = vmatpush1.msra.mxu0 0.0
    %71 = vmatprep.subr.mxu0 0.0
    %72 = vmatpush1.msra.mxu0 0.0
    %73 = vmatprep.subr.mxu0 0.0
    %74 = vmatpush1.msra.mxu0 0.0
    %75 = vmatprep.subr.mxu0 0.0
    %76 = vmatpush1.msra.mxu0 0.0
    %77 = vmatprep.subr.mxu0 0.0
    %78 = vmatpush1.msra.mxu0 0.0
    %79 = vmatprep.subr.mxu0 0.0
    %80 = vmatpush1.msra.mxu0 0.0
    %81 = vmatprep.subr.mxu0 0.0
    %82 = vmatpush1.msra.mxu0 %v49
    %83 = vmatprep.subr.mxu0 0.0
    %84 = vmatpush2.msra.mxu0 0.0
    %85 = vmatprep.subr.mxu0 0.0
    %86 = vmatpush2.msra.mxu0 0.0
    %87 = vmatprep.subr.mxu0 0.0
    %88 = vmatpush2.msra.mxu0 0.0
    %89 = vmatprep.subr.mxu0 0.0
    %90 = vmatpush2.msra.mxu0 0.0
    %91 = vmatprep.subr.mxu0 0.0
    %92 = vmatpush2.msra.mxu0 0.0
    %93 = vmatprep.subr.mxu0 0.0
    %94 = vmatpush2.msra.mxu0 0.0
    %95 = vmatprep.subr.mxu0 0.0
    %96 = vmatpush2.msra.mxu0 0.0
    %97 = vmatprep.subr.mxu0 0.0
    %98 = vmatpush2.msra.mxu0 0.0
    %99 = vmatprep.subr.mxu0 0.0
    %100 = vmatpush2.msra.mxu0 0.0
    %101 = vmatprep.subr.mxu0 0.0
    %102 = vmatpush2.msra.mxu0 0.0
    %103 = vmatprep.subr.mxu0 0.0
    %104 = vmatpush2.msra.mxu0 0.0
    %105 = vmatprep.subr.mxu0 0.0
    %106 = vmatpush2.msra.mxu0 0.0
    %107 = vmatprep.subr.mxu0 0.0
    %108 = vmatpush2.msra.mxu0 0.0
    %109 = vmatprep.subr.mxu0 0.0
    %110 = vmatpush2.msra.mxu0 0.0
    %111 = vmatprep.subr.mxu0 0.0
    %112 = vmatpush2.msra.mxu0 0.0
    %113 = vmatprep.subr.mxu0 0.0
    %114 = vmatpush2.msra.mxu0 0.0
    %115 = vmatprep.mubr.f32.mxu0 0.0
    %116 = vmatmul.mubr.f32.gmra.mxu0 %v45
    %v117 = vpop.f32.mrf.mxu0
    %v118 = vadd.f32 %v41, %v117
    %v119 = vpop.f32.mrf.mxu0
    %120 = vdwg.mxu0
    %v121 = vmax.f32 %v118, 0.0
    %v122 = vld [vmem:[#allocation2] sm:$0xff]
    %v123 = vld [vmem:[#allocation2 + $0x8] sm:$0xff]
    %v124 = vld [vmem:[#allocation2 + $0x10] sm:$0xff]
    %v125 = vld [vmem:[#allocation2 + $0x18] sm:$0xff]
    %v126 = vld [vmem:[#allocation2 + $0x20] sm:$0xff]
    %v127 = vld [vmem:[#allocation2 + $0x28] sm:$0xff]
    %v128 = vld [vmem:[#allocation2 + $0x30] sm:$0xff]
    %v129 = vld [vmem:[#allocation2 + $0x38] sm:$0xff]
    %v130 = vld [vmem:[#allocation2 + $0x40] sm:$0xff]
    %v131 = vld [vmem:[#allocation2 + $0x48] sm:$0xff]
    %v132 = vld [vmem:[#allocation2 + $0x50] sm:$0xff]
    %v133 = vld [vmem:[#allocation2 + $0x58] sm:$0xff]
    %v134 = vld [vmem:[#allocation2 + $0x60] sm:$0xff]
    %v135 = vld [vmem:[#allocation2 + $0x68] sm:$0xff]
    %v136 = vld [vmem:[#allocation2 + $0x70] sm:$0xff]
    %v137 = vld [vmem:[#allocation2 + $0x78] sm:$0xff]
    %v138 = vld [vmem:[%s4] sm:$0x1]
    %v140 = vlaneseq
    %v141 = vshrl.u32 %v140, 7
    %v142 = vsub.s32 0, %v141
    %v143 = vrot.slane %v138, %v142
    %145 = vmatprep.subr.mxu0 0.0
    %146 = vmatpush1.msra.mxu0 %v137
    %147 = vmatprep.subr.mxu0 0.0
    %148 = vmatpush1.msra.mxu0 %v136
    %149 = vmatprep.subr.mxu0 0.0
    %150 = vmatpush1.msra.mxu0 %v135
    %151 = vmatprep.subr.mxu0 0.0
    %152 = vmatpush1.msra.mxu0 %v134
    %153 = vmatprep.subr.mxu0 0.0
    %154 = vmatpush1.msra.mxu0 %v133
    %155 = vmatprep.subr.mxu0 0.0
    %156 = vmatpush1.msra.mxu0 %v132
    %157 = vmatprep.subr.mxu0 0.0
    %158 = vmatpush1.msra.mxu0 %v131
    %159 = vmatprep.subr.mxu0 0.0
    %160 = vmatpush1.msra.mxu0 %v130
    %161 = vmatprep.subr.mxu0 0.0
    %162 = vmatpush1.msra.mxu0 %v129
    %163 = vmatprep.subr.mxu0 0.0
    %164 = vmatpush1.msra.mxu0 %v128
    %165 = vmatprep.subr.mxu0 0.0
    %166 = vmatpush1.msra.mxu0 %v127
    %167 = vmatprep.subr.mxu0 0.0
    %168 = vmatpush1.msra.mxu0 %v126
    %169 = vmatprep.subr.mxu0 0.0
    %170 = vmatpush1.msra.mxu0 %v125
    %171 = vmatprep.subr.mxu0 0.0
    %172 = vmatpush1.msra.mxu0 %v124
    %173 = vmatprep.subr.mxu0 0.0
    %174 = vmatpush1.msra.mxu0 %v123
    %175 = vmatprep.subr.mxu0 0.0
    %176 = vmatpush1.msra.mxu0 %v122
    %177 = vmatprep.subr.mxu0 0.0
    %178 = vmatpush2.msra.mxu0 0.0
    %179 = vmatprep.subr.mxu0 0.0
    %180 = vmatpush2.msra.mxu0 0.0
    %181 = vmatprep.subr.mxu0 0.0
    %182 = vmatpush2.msra.mxu0 0.0
    %183 = vmatprep.subr.mxu0 0.0
    %184 = vmatpush2.msra.mxu0 0.0
    %185 = vmatprep.subr.mxu0 0.0
    %186 = vmatpush2.msra.mxu0 0.0
    %187 = vmatprep.subr.mxu0 0.0
    %188 = vmatpush2.msra.mxu0 0.0
    %189 = vmatprep.subr.mxu0 0.0
    %190 = vmatpush2.msra.mxu0 0.0
    %191 = vmatprep.subr.mxu0 0.0
    %192 = vmatpush2.msra.mxu0 0.0
    %193 = vmatprep.subr.mxu0 0.0
    %194 = vmatpush2.msra.mxu0 0.0
    %195 = vmatprep.subr.mxu0 0.0
    %196 = vmatpush2.msra.mxu0 0.0
    %197 = vmatprep.subr.mxu0 0.0
    %198 = vmatpush2.msra.mxu0 0.0
    %199 = vmatprep.subr.mxu0 0.0
    %200 = vmatpush2.msra.mxu0 0.0
    %201 = vmatprep.subr.mxu0 0.0
    %202 = vmatpush2.msra.mxu0 0.0
    %203 = vmatprep.subr.mxu0 0.0
    %204 = vmatpush2.msra.mxu0 0.0
    %205 = vmatprep.subr.mxu0 0.0
    %206 = vmatpush2.msra.mxu0 0.0
    %207 = vmatprep.subr.mxu0 0.0
    %208 = vmatpush2.msra.mxu0 0.0
    %209 = vmatprep.mubr.f32.mxu0 0.0
    %210 = vmatmul.mubr.f32.gmra.mxu0 %v121
    %v211 = vpop.f32.mrf.mxu0
    %v212 = vadd.f32 %v143, %v211
    %v213 = vpop.f32.mrf.mxu0
    %214 = vdwg.mxu0
    %215 = vst [vmem:[%s5] sm:$0xff] %v212
    // Predicated region
    $region26: #{net_forward.1} parent=1 // pred_check
      _
    $region27: #{net_forward.1} parent=1 // pred_check_branch
      %217 = sbr.rel (0) target = $region29
    $region28: #{net_forward.1} parent=1 // pred_region
      _
    $region29: #{net_forward.1} parent=1 // pred_fallthru
      _
    // Predicated region
    $region30: #{net_forward.1} parent=1 // pred_check
      _
    $region31: #{net_forward.1} parent=1 // pred_check_branch
      %219 = sbr.rel (0) target = $region33
    $region32: #{net_forward.1} parent=1 // pred_region
      _
    $region33: #{net_forward.1} parent=1 // pred_fallthru
      _
    %220 = vsyncpa [#allocation3], 1

</llo_original>
